<compile_context>
chip_gen: v6e
topology: v6e:2x2x1
jax: 0.10.0
libtpu: 0.0.40
codegen_flags: <defaults>
</compile_context>

<pallas_src>
import jax
import jax.numpy as jnp
from jax.experimental import pallas as pl
from jax.experimental.pallas import tpu as pltpu

HIDDEN = 128   # LSTM hidden size (from the module)
FC1 = 64       # fc1 output size
A_PAD = 128    # lane-dense padded width for every fc2 head


def _actor_kernel(act_idx_ref,                       # scalar prefetch (SMEM), used by index_maps
                  x_ref, h0_ref, c0_ref,             # (1,Din) (1,H) (1,H)
                  wih_ref, whh_ref, bg_ref,          # (Din,4H) (H,4H) (1,4H)
                  w1_ref, b1_ref,                    # (H,64) (1,64)
                  w2_ref, b2_ref, mask_ref,          # selected head: (1,64,A) (1,1,A) (1,1,A)
                  h_out_ref, c_out_ref, logits_ref, logp_ref):
    del act_idx_ref  # only consumed by the index_maps (head selection)

    x = x_ref[...]
    h0 = h0_ref[...]
    c0 = c0_ref[...]

    # ---- LSTM cell (PyTorch gate order: i, f, g, o) -------------------------
    gates = (jnp.dot(x, wih_ref[...], preferred_element_type=jnp.float32)
             + jnp.dot(h0, whh_ref[...], preferred_element_type=jnp.float32)
             + bg_ref[...])                                    # (1, 4*HIDDEN)

    i_g = jax.nn.sigmoid(gates[:, 0 * HIDDEN:1 * HIDDEN])
    f_g = jax.nn.sigmoid(gates[:, 1 * HIDDEN:2 * HIDDEN])
    g_g = jnp.tanh(gates[:, 2 * HIDDEN:3 * HIDDEN])
    o_g = jax.nn.sigmoid(gates[:, 3 * HIDDEN:4 * HIDDEN])

    c_new = f_g * c0 + i_g * g_g
    h_new = o_g * jnp.tanh(c_new)
    c_out_ref[...] = c_new
    h_out_ref[...] = h_new

    # ---- fc1 + ReLU ---------------------------------------------------------
    h1 = jnp.maximum(
        jnp.dot(h_new, w1_ref[...], preferred_element_type=jnp.float32) + b1_ref[...],
        0.0)                                                   # (1, 64)

    # ---- selected fc2 head + tanh (lane-dense, padded to A_PAD) -------------
    w2 = w2_ref[0]                                             # (64, A_PAD)
    b2 = b2_ref[0]                                             # (1, A_PAD)
    mask = mask_ref[0]                                         # (1, A_PAD), 1.0 on valid lanes

    out3 = jnp.dot(h1, w2, preferred_element_type=jnp.float32) + b2
    logits = jnp.tanh(out3)                                    # (1, A_PAD)

    # ---- masked log-softmax (Categorical.log_prob over valid lanes) ---------
    neg = jnp.float32(-1e30)
    masked = jnp.where(mask > 0, logits, neg)
    m = jnp.max(masked, axis=-1, keepdims=True)
    z = masked - m
    e = jnp.where(mask > 0, jnp.exp(z), 0.0)
    denom = jnp.sum(e, axis=-1, keepdims=True)
    logp = z - jnp.log(denom)

    logits_ref[...] = jnp.where(mask > 0, logits, 0.0)
    logp_ref[...] = jnp.where(mask > 0, logp, neg)


@jax.jit
def rnn_categorical_actor_forward(obs, act_idx, h0, c0, params):
    """One fused forward step.

    obs: (obs_dim,) f32, act_idx: int32 scalar, h0/c0: (1, HIDDEN) f32.
    Returns (logits_pad (A_PAD,), logp_pad (A_PAD,), h_new (1,H), c_new (1,H)).
    Valid entries of logits_pad / logp_pad are the first act_dim_list[act_idx].
    """
    w_ih, w_hh, b_g, w1, b1, w2_heads, b2_heads, mask_heads = params
    num_heads = w2_heads.shape[0]
    d_in_pad = w_ih.shape[0]

    act_idx = jnp.asarray(act_idx, jnp.int32).reshape((1,))
    norm = act_idx.astype(jnp.float32) / jnp.float32(num_heads)     # act_idx / lenth
    x = jnp.concatenate([obs.reshape(1, -1), norm.reshape(1, 1)], axis=-1)
    pad = d_in_pad - x.shape[1]
    if pad:  # static zero-padding of the input row to match the padded W_ih
        x = jnp.pad(x, ((0, 0), (0, pad)))

    full2 = lambda i, a: (0, 0)
    head3 = lambda i, a: (a[0], 0, 0)   # scalar-prefetch head selection

    h_new, c_new, logits, logp = pl.pallas_call(
        _actor_kernel,
        out_shape=(
            jax.ShapeDtypeStruct((1, HIDDEN), jnp.float32),
            jax.ShapeDtypeStruct((1, HIDDEN), jnp.float32),
            jax.ShapeDtypeStruct((1, A_PAD), jnp.float32),
            jax.ShapeDtypeStruct((1, A_PAD), jnp.float32),
        ),
        grid_spec=pltpu.PrefetchScalarGridSpec(
            num_scalar_prefetch=1,
            grid=(1,),
            in_specs=[
                pl.BlockSpec((1, d_in_pad), full2),            # x = [obs, norm_act_idx, 0...]
                pl.BlockSpec((1, HIDDEN), full2),              # h0
                pl.BlockSpec((1, HIDDEN), full2),              # c0
                pl.BlockSpec((d_in_pad, 4 * HIDDEN), full2),   # W_ih^T (padded rows)
                pl.BlockSpec((HIDDEN, 4 * HIDDEN), full2),     # W_hh^T
                pl.BlockSpec((1, 4 * HIDDEN), full2),          # b_ih + b_hh
                pl.BlockSpec((HIDDEN, FC1), full2),            # fc1 W^T
                pl.BlockSpec((1, FC1), full2),                 # fc1 b
                pl.BlockSpec((1, FC1, A_PAD), head3),          # fc2[act_idx] W^T (padded)
                pl.BlockSpec((1, 1, A_PAD), head3),            # fc2[act_idx] b   (padded)
                pl.BlockSpec((1, 1, A_PAD), head3),            # valid-lane mask
            ],
            out_specs=[
                pl.BlockSpec((1, HIDDEN), full2),
                pl.BlockSpec((1, HIDDEN), full2),
                pl.BlockSpec((1, A_PAD), full2),
                pl.BlockSpec((1, A_PAD), full2),
            ],
        ),
        compiler_params=pltpu.CompilerParams(
            dimension_semantics=("arbitrary",),
        ),
    )(act_idx, x, h0, c0, w_ih, w_hh, b_g, w1, b1, w2_heads, b2_heads, mask_heads)

    return logits[0], logp[0], h_new, c_new


# ----------------------------------------------------------------------------
# Parameter construction (matches PyTorch default inits; weights stored as
# (in_features, out_features) so kernels compute x @ W, i.e. x @ W_pt.T).
# ----------------------------------------------------------------------------
def init_params(key, obs_dim, act_dim_list):
    d_in = obs_dim + 1
    num_heads = len(act_dim_list)
    keys = jax.random.split(key, 6 + 2 * num_heads)

    def u(k, shape, fan):
        bound = 1.0 / jnp.sqrt(jnp.float32(fan))
        return jax.random.uniform(k, shape, jnp.float32, -bound, bound)

    # LSTM params: PyTorch uses U(-1/sqrt(hidden), 1/sqrt(hidden))
    w_ih = u(keys[0], (d_in, 4 * HIDDEN), HIDDEN)
    w_hh = u(keys[1], (HIDDEN, 4 * HIDDEN), HIDDEN)
    b_ih = u(keys[2], (1, 4 * HIDDEN), HIDDEN)
    b_hh = u(keys[3], (1, 4 * HIDDEN), HIDDEN)
    # fc1
    w1 = u(keys[4], (HIDDEN, FC1), HIDDEN)
    b1 = u(keys[5], (1, FC1), HIDDEN)
    # fc2 heads
    head_ws, head_bs = [], []
    for h, ad in enumerate(act_dim_list):
        head_ws.append(u(keys[6 + 2 * h], (FC1, ad), FC1))
        head_bs.append(u(keys[7 + 2 * h], (1, ad), FC1))
    return (w_ih, w_hh, b_ih, b_hh, w1, b1, head_ws, head_bs)


def pack_params(raw):
    """Pad / pack raw params into the TPU-friendly layout the kernel expects."""
    w_ih, w_hh, b_ih, b_hh, w1, b1, head_ws, head_bs = raw
    d_in = w_ih.shape[0]
    d_in_pad = ((d_in + 7) // 8) * 8            # sublane-align the tiny K dim
    w_ih_p = jnp.zeros((d_in_pad, 4 * HIDDEN), jnp.float32).at[:d_in].set(w_ih)
    b_g = b_ih + b_hh                           # fuse the two bias adds

    num_heads = len(head_ws)
    w2_heads = jnp.zeros((num_heads, FC1, A_PAD), jnp.float32)
    b2_heads = jnp.zeros((num_heads, 1, A_PAD), jnp.float32)
    mask_heads = jnp.zeros((num_heads, 1, A_PAD), jnp.float32)
    for h, (w, b) in enumerate(zip(head_ws, head_bs)):
        ad = w.shape[1]
        w2_heads = w2_heads.at[h, :, :ad].set(w)
        b2_heads = b2_heads.at[h, :, :ad].set(b)
        mask_heads = mask_heads.at[h, :, :ad].set(1.0)
    return (w_ih_p, w_hh, b_g, w1, b1, w2_heads, b2_heads, mask_heads)


def _reference_forward(obs, act_idx, h0, c0, raw, act_dim_list, act):
    """Pure-JAX reference matching the PyTorch single-sample forward."""
    w_ih, w_hh, b_ih, b_hh, w1, b1, head_ws, head_bs = raw
    num_heads = len(act_dim_list)
    x = jnp.concatenate(
        [obs, jnp.array([act_idx / num_heads], jnp.float32)])[None, :]
    gates = x @ w_ih + h0 @ w_hh + b_ih + b_hh
    i = jax.nn.sigmoid(gates[:, 0 * HIDDEN:1 * HIDDEN])
    f = jax.nn.sigmoid(gates[:, 1 * HIDDEN:2 * HIDDEN])
    g = jnp.tanh(gates[:, 2 * HIDDEN:3 * HIDDEN])
    o = jax.nn.sigmoid(gates[:, 3 * HIDDEN:4 * HIDDEN])
    c_new = f * c0 + i * g
    h_new = o * jnp.tanh(c_new)
    h1 = jnp.maximum(h_new @ w1 + b1, 0.0)
    logits = jnp.tanh(h1 @ head_ws[act_idx] + head_bs[act_idx])[0]
    logp_a = jax.nn.log_softmax(logits)[act]
    return logits, logp_a, h_new, c_new


if __name__ == "__main__":
    key = jax.random.PRNGKey(0)
    k_obs, k_h, k_c, k_params = jax.random.split(key, 4)

    obs_dim = 4
    act_dim_list = [3, 5, 4]     # -> lenth = input_lenth = 3 heads; LSTM input = obs_dim + 1
    act_idx = 1                  # selects the 5-way head
    act = 2                      # action for log_prob

    obs = jax.random.normal(k_obs, (obs_dim,), jnp.float32)
    h0 = 0.1 * jax.random.normal(k_h, (1, HIDDEN), jnp.float32)
    c0 = 0.1 * jax.random.normal(k_c, (1, HIDDEN), jnp.float32)

    raw = init_params(k_params, obs_dim, act_dim_list)
    params = pack_params(raw)

    logits_pad, logp_pad, h_new, c_new = rnn_categorical_actor_forward(
        obs, jnp.int32(act_idx), h0, c0, params)
    jax.block_until_ready((logits_pad, logp_pad, h_new, c_new))

    ad = act_dim_list[act_idx]
    logits = logits_pad[:ad]
    logp_a = logp_pad[act]

    ref_logits, ref_logp_a, ref_h, ref_c = _reference_forward(
        obs, act_idx, h0, c0, raw, act_dim_list, act)

    assert logits.shape == (ad,), logits.shape
    assert jnp.allclose(logits, ref_logits, atol=1e-5, rtol=1e-5), (logits, ref_logits)
    assert jnp.allclose(logp_a, ref_logp_a, atol=1e-5, rtol=1e-5), (logp_a, ref_logp_a)
    assert jnp.allclose(h_new, ref_h, atol=1e-5, rtol=1e-5)
    assert jnp.allclose(c_new, ref_c, atol=1e-5, rtol=1e-5)

    print("KERNEL_OK")
</pallas_src>

<mosaic_0001>
module attributes {stable_mosaic.version = 11 : i64} {
  func.func @_actor_kernel(%arg0: i32, %arg1: memref<1xi32, #tpu.memory_space<smem>>, %arg2: memref<1x8xf32, #tpu.memory_space<vmem>>, %arg3: memref<1x128xf32, #tpu.memory_space<vmem>>, %arg4: memref<1x128xf32, #tpu.memory_space<vmem>>, %arg5: memref<8x512xf32, #tpu.memory_space<vmem>>, %arg6: memref<128x512xf32, #tpu.memory_space<vmem>>, %arg7: memref<1x512xf32, #tpu.memory_space<vmem>>, %arg8: memref<128x64xf32, #tpu.memory_space<vmem>>, %arg9: memref<1x64xf32, #tpu.memory_space<vmem>>, %arg10: memref<1x64x128xf32, #tpu.memory_space<vmem>>, %arg11: memref<1x1x128xf32, #tpu.memory_space<vmem>>, %arg12: memref<1x1x128xf32, #tpu.memory_space<vmem>>, %arg13: memref<1x128xf32, #tpu.memory_space<vmem>>, %arg14: memref<1x128xf32, #tpu.memory_space<vmem>>, %arg15: memref<1x128xf32, #tpu.memory_space<vmem>>, %arg16: memref<1x128xf32, #tpu.memory_space<vmem>>) attributes {dimension_semantics = [#tpu.dimension_semantics<arbitrary>], iteration_bounds = array<i64: 1>, scalar_prefetch = 1 : i64, scratch_operands = 0 : i64, tpu.core_type = #tpu.core_type<tc>, window_params = [{pipeline_mode = #tpu.pipeline_mode<synchronous>, transform_indices = @transform_0, window_bounds = array<i64: 1, 8>}, {pipeline_mode = #tpu.pipeline_mode<synchronous>, transform_indices = @transform_1, window_bounds = array<i64: 1, 128>}, {pipeline_mode = #tpu.pipeline_mode<synchronous>, transform_indices = @transform_2, window_bounds = array<i64: 1, 128>}, {pipeline_mode = #tpu.pipeline_mode<synchronous>, transform_indices = @transform_3, window_bounds = array<i64: 8, 512>}, {pipeline_mode = #tpu.pipeline_mode<synchronous>, transform_indices = @transform_4, window_bounds = array<i64: 128, 512>}, {pipeline_mode = #tpu.pipeline_mode<synchronous>, transform_indices = @transform_5, window_bounds = array<i64: 1, 512>}, {pipeline_mode = #tpu.pipeline_mode<synchronous>, transform_indices = @transform_6, window_bounds = array<i64: 128, 64>}, {pipeline_mode = #tpu.pipeline_mode<synchronous>, transform_indices = @transform_7, window_bounds = array<i64: 1, 64>}, {transform_indices = @transform_8, window_bounds = array<i64: 1, 64, 128>}, {transform_indices = @transform_9, window_bounds = array<i64: 1, 1, 128>}, {transform_indices = @transform_10, window_bounds = array<i64: 1, 1, 128>}, {pipeline_mode = #tpu.pipeline_mode<synchronous>, transform_indices = @transform_11, window_bounds = array<i64: 1, 128>}, {pipeline_mode = #tpu.pipeline_mode<synchronous>, transform_indices = @transform_12, window_bounds = array<i64: 1, 128>}, {pipeline_mode = #tpu.pipeline_mode<synchronous>, transform_indices = @transform_13, window_bounds = array<i64: 1, 128>}, {pipeline_mode = #tpu.pipeline_mode<synchronous>, transform_indices = @transform_14, window_bounds = array<i64: 1, 128>}]} {
    %c0 = arith.constant 0 : index
    %c0_0 = arith.constant 0 : index
    %0 = vector.load %arg2[%c0, %c0_0] : memref<1x8xf32, #tpu.memory_space<vmem>>, vector<1x8xf32>
    %c0_1 = arith.constant 0 : index
    %c0_2 = arith.constant 0 : index
    %1 = vector.load %arg3[%c0_1, %c0_2] : memref<1x128xf32, #tpu.memory_space<vmem>>, vector<1x128xf32>
    %c0_3 = arith.constant 0 : index
    %c0_4 = arith.constant 0 : index
    %2 = vector.load %arg4[%c0_3, %c0_4] : memref<1x128xf32, #tpu.memory_space<vmem>>, vector<1x128xf32>
    %c0_5 = arith.constant 0 : index
    %c0_6 = arith.constant 0 : index
    %3 = vector.load %arg5[%c0_5, %c0_6] : memref<8x512xf32, #tpu.memory_space<vmem>>, vector<8x512xf32>
    %cst = arith.constant dense<0.000000e+00> : vector<1x512xf32>
    %4 = tpu.matmul %0, %3, %cst {dimension_numbers = #tpu.dot_dimension_numbers<[1], [0], [0], [1], [0, 0, 1, 1], [], []>} : vector<1x8xf32>, vector<8x512xf32>, vector<1x512xf32> -> vector<1x512xf32>
    %c0_7 = arith.constant 0 : index
    %c0_8 = arith.constant 0 : index
    %5 = vector.load %arg6[%c0_7, %c0_8] : memref<128x512xf32, #tpu.memory_space<vmem>>, vector<128x512xf32>
    %cst_9 = arith.constant dense<0.000000e+00> : vector<1x512xf32>
    %6 = tpu.matmul %1, %5, %cst_9 {dimension_numbers = #tpu.dot_dimension_numbers<[1], [0], [0], [1], [0, 0, 1, 1], [], []>} : vector<1x128xf32>, vector<128x512xf32>, vector<1x512xf32> -> vector<1x512xf32>
    %7 = arith.addf %4, %6 : vector<1x512xf32>
    %c0_10 = arith.constant 0 : index
    %c0_11 = arith.constant 0 : index
    %8 = vector.load %arg7[%c0_10, %c0_11] : memref<1x512xf32, #tpu.memory_space<vmem>>, vector<1x512xf32>
    %9 = arith.addf %7, %8 : vector<1x512xf32>
    %10 = vector.extract_strided_slice %9 {offsets = [0, 0], sizes = [1, 128], strides = [1, 1]} : vector<1x512xf32> to vector<1x128xf32>
    %11 = arith.negf %10 : vector<1x128xf32>
    %12 = math.exp %11 : vector<1x128xf32>
    %cst_12 = arith.constant 1.000000e+00 : f32
    %13 = vector.broadcast %cst_12 : f32 to vector<1x128xf32>
    %14 = arith.addf %13, %12 : vector<1x128xf32>
    %15 = arith.divf %13, %14 : vector<1x128xf32>
    %16 = vector.extract_strided_slice %9 {offsets = [0, 128], sizes = [1, 128], strides = [1, 1]} : vector<1x512xf32> to vector<1x128xf32>
    %17 = arith.negf %16 : vector<1x128xf32>
    %18 = math.exp %17 : vector<1x128xf32>
    %cst_13 = arith.constant 1.000000e+00 : f32
    %19 = vector.broadcast %cst_13 : f32 to vector<1x128xf32>
    %20 = arith.addf %19, %18 : vector<1x128xf32>
    %21 = arith.divf %19, %20 : vector<1x128xf32>
    %22 = vector.extract_strided_slice %9 {offsets = [0, 256], sizes = [1, 128], strides = [1, 1]} : vector<1x512xf32> to vector<1x128xf32>
    %23 = math.tanh %22 : vector<1x128xf32>
    %24 = vector.extract_strided_slice %9 {offsets = [0, 384], sizes = [1, 128], strides = [1, 1]} : vector<1x512xf32> to vector<1x128xf32>
    %25 = arith.negf %24 : vector<1x128xf32>
    %26 = math.exp %25 : vector<1x128xf32>
    %cst_14 = arith.constant 1.000000e+00 : f32
    %27 = vector.broadcast %cst_14 : f32 to vector<1x128xf32>
    %28 = arith.addf %27, %26 : vector<1x128xf32>
    %29 = arith.divf %27, %28 : vector<1x128xf32>
    %30 = arith.mulf %21, %2 : vector<1x128xf32>
    %31 = arith.mulf %15, %23 : vector<1x128xf32>
    %32 = arith.addf %30, %31 : vector<1x128xf32>
    %33 = math.tanh %32 : vector<1x128xf32>
    %34 = arith.mulf %29, %33 : vector<1x128xf32>
    %c0_15 = arith.constant 0 : index
    %c0_16 = arith.constant 0 : index
    %35 = vector.load %arg14[%c0_15, %c0_16] : memref<1x128xf32, #tpu.memory_space<vmem>>, vector<1x128xf32>
    tpu.vector_store %arg14[%c0_15, %c0_16], %32 {strides = array<i32>} : memref<1x128xf32, #tpu.memory_space<vmem>>, vector<1x128xf32>,
    %c0_17 = arith.constant 0 : index
    %c0_18 = arith.constant 0 : index
    %36 = vector.load %arg13[%c0_17, %c0_18] : memref<1x128xf32, #tpu.memory_space<vmem>>, vector<1x128xf32>
    tpu.vector_store %arg13[%c0_17, %c0_18], %34 {strides = array<i32>} : memref<1x128xf32, #tpu.memory_space<vmem>>, vector<1x128xf32>,
    %c0_19 = arith.constant 0 : index
    %c0_20 = arith.constant 0 : index
    %37 = vector.load %arg8[%c0_19, %c0_20] : memref<128x64xf32, #tpu.memory_space<vmem>>, vector<128x64xf32>
    %cst_21 = arith.constant dense<0.000000e+00> : vector<1x64xf32>
    %38 = tpu.matmul %34, %37, %cst_21 {dimension_numbers = #tpu.dot_dimension_numbers<[1], [0], [0], [1], [0, 0, 1, 1], [], []>} : vector<1x128xf32>, vector<128x64xf32>, vector<1x64xf32> -> vector<1x64xf32>
    %c0_22 = arith.constant 0 : index
    %c0_23 = arith.constant 0 : index
    %39 = vector.load %arg9[%c0_22, %c0_23] : memref<1x64xf32, #tpu.memory_space<vmem>>, vector<1x64xf32>
    %40 = arith.addf %38, %39 : vector<1x64xf32>
    %cst_24 = arith.constant 0.000000e+00 : f32
    %41 = vector.broadcast %cst_24 : f32 to vector<1x64xf32>
    %42 = arith.maximumf %40, %41 : vector<1x64xf32>
    %c0_25 = arith.constant 0 : index
    %c0_26 = arith.constant 0 : index
    %c0_27 = arith.constant 0 : index
    %43 = vector.load %arg10[%c0_25, %c0_26, %c0_27] : memref<1x64x128xf32, #tpu.memory_space<vmem>>, vector<1x64x128xf32>
    %44 = vector.shape_cast %43 : vector<1x64x128xf32> to vector<64x128xf32>
    %c0_28 = arith.constant 0 : index
    %c0_29 = arith.constant 0 : index
    %c0_30 = arith.constant 0 : index
    %45 = vector.load %arg11[%c0_28, %c0_29, %c0_30] : memref<1x1x128xf32, #tpu.memory_space<vmem>>, vector<1x1x128xf32>
    %46 = vector.shape_cast %45 : vector<1x1x128xf32> to vector<1x128xf32>
    %c0_31 = arith.constant 0 : index
    %c0_32 = arith.constant 0 : index
    %c0_33 = arith.constant 0 : index
    %47 = vector.load %arg12[%c0_31, %c0_32, %c0_33] : memref<1x1x128xf32, #tpu.memory_space<vmem>>, vector<1x1x128xf32>
    %48 = vector.shape_cast %47 : vector<1x1x128xf32> to vector<1x128xf32>
    %cst_34 = arith.constant dense<0.000000e+00> : vector<1x128xf32>
    %49 = tpu.matmul %42, %44, %cst_34 {dimension_numbers = #tpu.dot_dimension_numbers<[1], [0], [0], [1], [0, 0, 1, 1], [], []>} : vector<1x64xf32>, vector<64x128xf32>, vector<1x128xf32> -> vector<1x128xf32>
    %50 = arith.addf %49, %46 : vector<1x128xf32>
    %51 = math.tanh %50 : vector<1x128xf32>
    %cst_35 = arith.constant 0.000000e+00 : f32
    %52 = vector.broadcast %cst_35 : f32 to vector<1x128xf32>
    %53 = arith.cmpf ogt, %48, %52 : vector<1x128xf32>
    %cst_36 = arith.constant -1.000000e+30 : f32
    %54 = vector.broadcast %cst_36 : f32 to vector<1x128xf32>
    %55 = arith.select %53, %51, %54 : vector<1x128xi1>, vector<1x128xf32>
    %cst_37 = arith.constant dense<0xFF800000> : vector<1xf32>
    %56 = vector.multi_reduction <maximumf>, %55, %cst_37 [1] : vector<1x128xf32> to vector<1xf32>
    %57 = vector.shape_cast %56 : vector<1xf32> to vector<1x1xf32>
    %58 = vector.broadcast %57 : vector<1x1xf32> to vector<1x128xf32>
    %59 = arith.subf %55, %58 : vector<1x128xf32>
    %cst_38 = arith.constant 0.000000e+00 : f32
    %60 = vector.broadcast %cst_38 : f32 to vector<1x128xf32>
    %61 = arith.cmpf ogt, %48, %60 : vector<1x128xf32>
    %62 = math.exp %59 : vector<1x128xf32>
    %cst_39 = arith.constant 0.000000e+00 : f32
    %63 = vector.broadcast %cst_39 : f32 to vector<1x128xf32>
    %64 = arith.select %61, %62, %63 : vector<1x128xi1>, vector<1x128xf32>
    %cst_40 = arith.constant dense<0.000000e+00> : vector<1xf32>
    %65 = vector.multi_reduction <add>, %64, %cst_40 [1] : vector<1x128xf32> to vector<1xf32>
    %66 = vector.shape_cast %65 : vector<1xf32> to vector<1x1xf32>
    %67 = math.log %66 : vector<1x1xf32>
    %68 = vector.broadcast %67 : vector<1x1xf32> to vector<1x128xf32>
    %69 = arith.subf %59, %68 : vector<1x128xf32>
    %cst_41 = arith.constant 0.000000e+00 : f32
    %70 = vector.broadcast %cst_41 : f32 to vector<1x128xf32>
    %71 = arith.cmpf ogt, %48, %70 : vector<1x128xf32>
    %cst_42 = arith.constant 0.000000e+00 : f32
    %72 = vector.broadcast %cst_42 : f32 to vector<1x128xf32>
    %73 = arith.select %71, %51, %72 : vector<1x128xi1>, vector<1x128xf32>
    %c0_43 = arith.constant 0 : index
    %c0_44 = arith.constant 0 : index
    %74 = vector.load %arg15[%c0_43, %c0_44] : memref<1x128xf32, #tpu.memory_space<vmem>>, vector<1x128xf32>
    tpu.vector_store %arg15[%c0_43, %c0_44], %73 {strides = array<i32>} : memref<1x128xf32, #tpu.memory_space<vmem>>, vector<1x128xf32>,
    %cst_45 = arith.constant 0.000000e+00 : f32
    %75 = vector.broadcast %cst_45 : f32 to vector<1x128xf32>
    %76 = arith.cmpf ogt, %48, %75 : vector<1x128xf32>
    %cst_46 = arith.constant -1.000000e+30 : f32
    %77 = vector.broadcast %cst_46 : f32 to vector<1x128xf32>
    %78 = arith.select %76, %69, %77 : vector<1x128xi1>, vector<1x128xf32>
    %c0_47 = arith.constant 0 : index
    %c0_48 = arith.constant 0 : index
    %79 = vector.load %arg16[%c0_47, %c0_48] : memref<1x128xf32, #tpu.memory_space<vmem>>, vector<1x128xf32>
    tpu.vector_store %arg16[%c0_47, %c0_48], %78 {strides = array<i32>} : memref<1x128xf32, #tpu.memory_space<vmem>>, vector<1x128xf32>,
    return
  }
  func.func @transform_0(%arg0: i32, %arg1: memref<1xi32, #tpu.memory_space<smem>>) -> (i32, i32) {
    %c0_i32 = arith.constant 0 : i32
    %c0_i32_0 = arith.constant 0 : i32
    %c0_i32_1 = arith.constant 0 : i32
    return %c0_i32, %c0_i32_0 : i32, i32
  }
  func.func @transform_1(%arg0: i32, %arg1: memref<1xi32, #tpu.memory_space<smem>>) -> (i32, i32) {
    %c0_i32 = arith.constant 0 : i32
    %c0_i32_0 = arith.constant 0 : i32
    %c0_i32_1 = arith.constant 0 : i32
    return %c0_i32, %c0_i32_0 : i32, i32
  }
  func.func @transform_2(%arg0: i32, %arg1: memref<1xi32, #tpu.memory_space<smem>>) -> (i32, i32) {
    %c0_i32 = arith.constant 0 : i32
    %c0_i32_0 = arith.constant 0 : i32
    %c0_i32_1 = arith.constant 0 : i32
    return %c0_i32, %c0_i32_0 : i32, i32
  }
  func.func @transform_3(%arg0: i32, %arg1: memref<1xi32, #tpu.memory_space<smem>>) -> (i32, i32) {
    %c0_i32 = arith.constant 0 : i32
    %c0_i32_0 = arith.constant 0 : i32
    %c0_i32_1 = arith.constant 0 : i32
    return %c0_i32, %c0_i32_0 : i32, i32
  }
  func.func @transform_4(%arg0: i32, %arg1: memref<1xi32, #tpu.memory_space<smem>>) -> (i32, i32) {
    %c0_i32 = arith.constant 0 : i32
    %c0_i32_0 = arith.constant 0 : i32
    %c0_i32_1 = arith.constant 0 : i32
    return %c0_i32, %c0_i32_0 : i32, i32
  }
  func.func @transform_5(%arg0: i32, %arg1: memref<1xi32, #tpu.memory_space<smem>>) -> (i32, i32) {
    %c0_i32 = arith.constant 0 : i32
    %c0_i32_0 = arith.constant 0 : i32
    %c0_i32_1 = arith.constant 0 : i32
    return %c0_i32, %c0_i32_0 : i32, i32
  }
  func.func @transform_6(%arg0: i32, %arg1: memref<1xi32, #tpu.memory_space<smem>>) -> (i32, i32) {
    %c0_i32 = arith.constant 0 : i32
    %c0_i32_0 = arith.constant 0 : i32
    %c0_i32_1 = arith.constant 0 : i32
    return %c0_i32, %c0_i32_0 : i32, i32
  }
  func.func @transform_7(%arg0: i32, %arg1: memref<1xi32, #tpu.memory_space<smem>>) -> (i32, i32) {
    %c0_i32 = arith.constant 0 : i32
    %c0_i32_0 = arith.constant 0 : i32
    %c0_i32_1 = arith.constant 0 : i32
    return %c0_i32, %c0_i32_0 : i32, i32
  }
  func.func @transform_8(%arg0: i32, %arg1: memref<1xi32, #tpu.memory_space<smem>>) -> (i32, i32, i32) {
    %c0 = arith.constant 0 : index
    %0 = memref.load %arg1[%c0] : memref<1xi32, #tpu.memory_space<smem>>
    %c0_i32 = arith.constant 0 : i32
    %c0_i32_0 = arith.constant 0 : i32
    %c0_i32_1 = arith.constant 0 : i32
    return %0, %c0_i32, %c0_i32_0 : i32, i32, i32
  }
  func.func @transform_9(%arg0: i32, %arg1: memref<1xi32, #tpu.memory_space<smem>>) -> (i32, i32, i32) {
    %c0 = arith.constant 0 : index
    %0 = memref.load %arg1[%c0] : memref<1xi32, #tpu.memory_space<smem>>
    %c0_i32 = arith.constant 0 : i32
    %c0_i32_0 = arith.constant 0 : i32
    %c0_i32_1 = arith.constant 0 : i32
    return %0, %c0_i32, %c0_i32_0 : i32, i32, i32
  }
  func.func @transform_10(%arg0: i32, %arg1: memref<1xi32, #tpu.memory_space<smem>>) -> (i32, i32, i32) {
    %c0 = arith.constant 0 : index
    %0 = memref.load %arg1[%c0] : memref<1xi32, #tpu.memory_space<smem>>
    %c0_i32 = arith.constant 0 : i32
    %c0_i32_0 = arith.constant 0 : i32
    %c0_i32_1 = arith.constant 0 : i32
    return %0, %c0_i32, %c0_i32_0 : i32, i32, i32
  }
  func.func @transform_11(%arg0: i32, %arg1: memref<1xi32, #tpu.memory_space<smem>>) -> (i32, i32) {
    %c0_i32 = arith.constant 0 : i32
    %c0_i32_0 = arith.constant 0 : i32
    %c0_i32_1 = arith.constant 0 : i32
    return %c0_i32, %c0_i32_0 : i32, i32
  }
  func.func @transform_12(%arg0: i32, %arg1: memref<1xi32, #tpu.memory_space<smem>>) -> (i32, i32) {
    %c0_i32 = arith.constant 0 : i32
    %c0_i32_0 = arith.constant 0 : i32
    %c0_i32_1 = arith.constant 0 : i32
    return %c0_i32, %c0_i32_0 : i32, i32
  }
  func.func @transform_13(%arg0: i32, %arg1: memref<1xi32, #tpu.memory_space<smem>>) -> (i32, i32) {
    %c0_i32 = arith.constant 0 : i32
    %c0_i32_0 = arith.constant 0 : i32
    %c0_i32_1 = arith.constant 0 : i32
    return %c0_i32, %c0_i32_0 : i32, i32
  }
  func.func @transform_14(%arg0: i32, %arg1: memref<1xi32, #tpu.memory_space<smem>>) -> (i32, i32) {
    %c0_i32 = arith.constant 0 : i32
    %c0_i32_0 = arith.constant 0 : i32
    %c0_i32_1 = arith.constant 0 : i32
    return %c0_i32, %c0_i32_0 : i32, i32
  }
}

</mosaic_0001>

<llo_original>
// kernel: rnn_categorical_actor_forward.1
$region0: #{rnn_categorical_actor_forward.1}
  #allocation0 [shape = 'u32[]', space=smem, size = 0x4, offset = 0x4, fixed_abs, tag = 'smem constant byte address 0x4 - core index']
  #allocation1 [shape = 'u32[144,128]{1,0:T(1,128)}', space=vmem, size = 0x12000, scoped, tag = 'internal scratch']
  #allocation2 [shape = 's32[1]{0}', space=sflag, size = 0x4, scoped, tag = 'scoped memory for rnn_categorical_actor_forward.1']
  #allocation3 [shape = 's32[1]{0:T(128)S(6)}', space=smem, size = 0x200, scoped, tag = 'prefetched SMEM operand 0']
  %s0 = inlined_call_operand.<no memory space> [shape: s32[1], index: 0, kind: input, shape index: {}]
  %s1 = inlined_call_operand.vmem [shape: f32[1,8], index: 1, kind: input, shape index: {}]
  %s2 = inlined_call_operand.vmem [shape: f32[1,128], index: 2, kind: input, shape index: {}]
  %s3 = inlined_call_operand.vmem [shape: f32[1,128], index: 3, kind: input, shape index: {}]
  %s4 = inlined_call_operand.hbm [shape: f32[8,512], index: 4, kind: input, shape index: {}]
  %s5 = inlined_call_operand.hbm [shape: f32[128,512], index: 5, kind: input, shape index: {}]
  %s6 = inlined_call_operand.vmem [shape: f32[1,512], index: 6, kind: input, shape index: {}]
  %s7 = inlined_call_operand.vmem [shape: f32[128,64], index: 7, kind: input, shape index: {}]
  %s8 = inlined_call_operand.vmem [shape: f32[1,64], index: 8, kind: input, shape index: {}]
  %s9 = inlined_call_operand.vmem [shape: f32[3,64,128], index: 9, kind: input, shape index: {}]
  %s10 = inlined_call_operand.vmem [shape: f32[3,1,128], index: 10, kind: input, shape index: {}]
  %s11 = inlined_call_operand.vmem [shape: f32[3,1,128], index: 11, kind: input, shape index: {}]
  %s12 = inlined_call_operand.hbm [shape: f32[1,128], index: 12, kind: output, shape index: {0}]
  %s13 = inlined_call_operand.hbm [shape: f32[1,128], index: 13, kind: output, shape index: {1}]
  %s14 = inlined_call_operand.hbm [shape: f32[1,128], index: 14, kind: output, shape index: {2}]
  %s15 = inlined_call_operand.hbm [shape: f32[1,128], index: 15, kind: output, shape index: {3}]
  %16 = xla_tuple %s12, %s13, %s14, %s15
  %s17 = sld [smem:[#allocation0]]
  $region86: #{rnn_categorical_actor_forward.1} parent=0
    _
  %s19 = ssub.s32 1, %s17
  %s20 = scalar_select 0, %s19, %s17
  %21 = sst [smem:[#allocation3]] %s0
  $region1: #{rnn_categorical_actor_forward.1} parent=0
    #allocation4 [shape = 'u8[16384]{0}', space=vmem, size = 0x4000, scoped, tag = 'input window, operand 4, single buffered']
    #allocation5 [shape = 's32[1]{0}', space=sflag, size = 0x4, scoped, tag = 'scoped memory for rnn_categorical_actor_forward.1']
    #allocation6 [shape = 's32[1]{0}', space=sflag, size = 0x4, scoped, tag = 'scoped memory for rnn_categorical_actor_forward.1']
    #allocation7 [shape = 'u8[262144]{0}', space=vmem, size = 0x40000, scoped, tag = 'input window, operand 5, single buffered']
    #allocation8 [shape = 's32[1]{0}', space=sflag, size = 0x4, scoped, tag = 'scoped memory for rnn_categorical_actor_forward.1']
    #allocation9 [shape = 'u8[512]{0}', space=vmem, size = 0x400, scoped, tag = 'output window, operand 0, single buffered']
    #allocation10 [shape = 'u8[512]{0}', space=vmem, size = 0x400, scoped, tag = 'output window, operand 1, single buffered']
    #allocation11 [shape = 's32[1]{0}', space=sflag, size = 0x4, scoped, tag = 'scoped memory for rnn_categorical_actor_forward.1']
    #allocation12 [shape = 'u8[512]{0}', space=vmem, size = 0x400, scoped, tag = 'output window, operand 2, single buffered']
    #allocation13 [shape = 'u8[512]{0}', space=vmem, size = 0x400, scoped, tag = 'output window, operand 3, single buffered']
    #allocation14 [shape = 's32[1]{0}', space=sflag, size = 0x4, scoped, tag = 'scoped memory for rnn_categorical_actor_forward.1']
    %22 = vsyncpa [#allocation5], 0
    %23 = vsyncpa [#allocation8], 0
    %24 = vsyncpa [#allocation6], 0
    %25 = vsyncpa [#allocation11], 0
    %26 = vsyncpa [#allocation14], 0
    // Predicated region
    $region2: #{rnn_categorical_actor_forward.1} parent=1 // pred_check
      _
    $region3: #{rnn_categorical_actor_forward.1} parent=1 // pred_check_branch
      %28 = sbr.rel (0) target = $region5
    $region4: #{rnn_categorical_actor_forward.1} parent=1 // pred_region
      _
    $region5: #{rnn_categorical_actor_forward.1} parent=1 // pred_fallthru
      _
    // Predicated region
    $region6: #{rnn_categorical_actor_forward.1} parent=1 // pred_check
      _
    $region7: #{rnn_categorical_actor_forward.1} parent=1 // pred_check_branch
      %30 = sbr.rel (0) target = $region9
    $region8: #{rnn_categorical_actor_forward.1} parent=1 // pred_region
      _
    $region9: #{rnn_categorical_actor_forward.1} parent=1 // pred_fallthru
      _
    // Predicated region
    $region10: #{rnn_categorical_actor_forward.1} parent=1 // pred_check
      _
    $region11: #{rnn_categorical_actor_forward.1} parent=1 // pred_check_branch
      %32 = sbr.rel (0) target = $region13
    $region12: #{rnn_categorical_actor_forward.1} parent=1 // pred_region
      _
    $region13: #{rnn_categorical_actor_forward.1} parent=1 // pred_fallthru
      _
    // Predicated region
    $region14: #{rnn_categorical_actor_forward.1} parent=1 // pred_check
      _
    $region15: #{rnn_categorical_actor_forward.1} parent=1 // pred_check_branch
      %34 = sbr.rel (0) target = $region17
    $region16: #{rnn_categorical_actor_forward.1} parent=1 // pred_region
      %s36 = ssub.s32 512, 512
      %37 = vsyncadd [#allocation5], %s36
      %s39 = sshll.u32 [#allocation4], 4
      %s40 = int_to_ptr.vmem [resolvable:$true] %s39
      %42 = dma.hbm_to_vmem [thread:$0]  %s4, 512, %s40, [#allocation5]
    $region17: #{rnn_categorical_actor_forward.1} parent=1 // pred_fallthru
      _
    // Predicated region
    $region18: #{rnn_categorical_actor_forward.1} parent=1 // pred_check
      _
    $region19: #{rnn_categorical_actor_forward.1} parent=1 // pred_check_branch
      %44 = sbr.rel (0) target = $region21
    $region20: #{rnn_categorical_actor_forward.1} parent=1 // pred_region
      %s46 = ssub.s32 8192, 8192
      %47 = vsyncadd [#allocation8], %s46
      %s48 = sshll.u32 [#allocation7], 4
      %s49 = int_to_ptr.vmem [resolvable:$true] %s48
      %54 = dma.hbm_to_vmem [thread:$0]  %s5, 8192, %s49, [#allocation8], 512, 512, 32
    $region21: #{rnn_categorical_actor_forward.1} parent=1 // pred_fallthru
      _
    // Predicated region
    $region22: #{rnn_categorical_actor_forward.1} parent=1 // pred_check
      _
    $region23: #{rnn_categorical_actor_forward.1} parent=1 // pred_check_branch
      %56 = sbr.rel (0) target = $region25
    $region24: #{rnn_categorical_actor_forward.1} parent=1 // pred_region
      _
    $region25: #{rnn_categorical_actor_forward.1} parent=1 // pred_fallthru
      _
    // Predicated region
    $region26: #{rnn_categorical_actor_forward.1} parent=1 // pred_check
      _
    $region27: #{rnn_categorical_actor_forward.1} parent=1 // pred_check_branch
      %58 = sbr.rel (0) target = $region29
    $region28: #{rnn_categorical_actor_forward.1} parent=1 // pred_region
      _
    $region29: #{rnn_categorical_actor_forward.1} parent=1 // pred_fallthru
      _
    // Predicated region
    $region30: #{rnn_categorical_actor_forward.1} parent=1 // pred_check
      _
    $region31: #{rnn_categorical_actor_forward.1} parent=1 // pred_check_branch
      %60 = sbr.rel (0) target = $region33
    $region32: #{rnn_categorical_actor_forward.1} parent=1 // pred_region
      _
    $region33: #{rnn_categorical_actor_forward.1} parent=1 // pred_fallthru
      _
    // Predicated region
    $region34: #{rnn_categorical_actor_forward.1} parent=1 // pred_check
      _
    $region35: #{rnn_categorical_actor_forward.1} parent=1 // pred_check_branch
      %62 = sbr.rel (0) target = $region37
    $region36: #{rnn_categorical_actor_forward.1} parent=1 // pred_region
      %s63 = sld [smem:[#allocation3]]
      %p64 = scmp.lt.s32.totalorder %s63, 2
      %s65 = scalar_select %p64, %s63, 2
      %s66 = smul.addr %s65, 8
      %s67 = smul.addr %s66, 8
      %s68 = scalar_lea.vmem %s9, %s67
      %s69 = sld [smem:[#allocation3]]
    $region37: #{rnn_categorical_actor_forward.1} parent=1 // pred_fallthru
      _
    // Predicated region
    $region38: #{rnn_categorical_actor_forward.1} parent=1 // pred_check
      _
    $region39: #{rnn_categorical_actor_forward.1} parent=1 // pred_check_branch
      %71 = sbr.rel (0) target = $region41
    $region40: #{rnn_categorical_actor_forward.1} parent=1 // pred_region
      %s72 = sld [smem:[#allocation3]]
      %p73 = scmp.lt.s32.totalorder %s72, 2
      %s74 = scalar_select %p73, %s72, 2
      %s75 = scalar_lea.vmem %s10, %s74
      %s76 = sld [smem:[#allocation3]]
    $region41: #{rnn_categorical_actor_forward.1} parent=1 // pred_fallthru
      _
    // Predicated region
    $region42: #{rnn_categorical_actor_forward.1} parent=1 // pred_check
      _
    $region43: #{rnn_categorical_actor_forward.1} parent=1 // pred_check_branch
      %78 = sbr.rel (0) target = $region45
    $region44: #{rnn_categorical_actor_forward.1} parent=1 // pred_region
      %s79 = sld [smem:[#allocation3]]
      %p80 = scmp.lt.s32.totalorder %s79, 2
      %s81 = scalar_select %p80, %s79, 2
      %s82 = scalar_lea.vmem %s11, %s81
      %s83 = sld [smem:[#allocation3]]
    $region45: #{rnn_categorical_actor_forward.1} parent=1 // pred_fallthru
      _
    // Predicated region
    $region46: #{rnn_categorical_actor_forward.1} parent=1 // pred_check
      _
    $region47: #{rnn_categorical_actor_forward.1} parent=1 // pred_check_branch
      %85 = sbr.rel (0) target = $region49
    $region48: #{rnn_categorical_actor_forward.1} parent=1 // pred_region
      %86 = dma.done [#allocation5], 512
    $region49: #{rnn_categorical_actor_forward.1} parent=1 // pred_fallthru
      _
    // Predicated region
    $region50: #{rnn_categorical_actor_forward.1} parent=1 // pred_check
      _
    $region51: #{rnn_categorical_actor_forward.1} parent=1 // pred_check_branch
      %88 = sbr.rel (0) target = $region53
    $region52: #{rnn_categorical_actor_forward.1} parent=1 // pred_region
      %89 = dma.done [#allocation8], 8192
    $region53: #{rnn_categorical_actor_forward.1} parent=1 // pred_fallthru
      _
    %s90 = sld [smem:[#allocation3]]
    %p91 = scmp.lt.s32.totalorder %s90, 2
    %s92 = scalar_select %p91, %s90, 2
    %s93 = smul.addr %s92, 8
    %s94 = smul.addr %s93, 8
    %s95 = scalar_lea.vmem %s9, %s94
    %s96 = sld [smem:[#allocation3]]
    %p97 = scmp.lt.s32.totalorder %s96, 2
    %s98 = scalar_select %p97, %s96, 2
    %s99 = scalar_lea.vmem %s10, %s98
    %s100 = sld [smem:[#allocation3]]
    %p101 = scmp.lt.s32.totalorder %s100, 2
    %s102 = scalar_select %p101, %s100, 2
    %s103 = scalar_lea.vmem %s11, %s102
    %s104 = sld [smem:[#allocation3]]
    %p105 = scmp.lt.s32.totalorder %s104, 2
    %s106 = scalar_select %p105, %s104, 2
    %s107 = smul.addr %s106, 8
    %s108 = smul.addr %s107, 8
    %s109 = scalar_lea.vmem %s9, %s108
    %s110 = sld [smem:[#allocation3]]
    %s111 = sld [smem:[#allocation3]]
    %p112 = scmp.lt.s32.totalorder %s111, 2
    %s113 = scalar_select %p112, %s111, 2
    %s114 = scalar_lea.vmem %s10, %s113
    %s115 = sld [smem:[#allocation3]]
    %s116 = sld [smem:[#allocation3]]
    %p117 = scmp.lt.s32.totalorder %s116, 2
    %s118 = scalar_select %p117, %s116, 2
    %s119 = scalar_lea.vmem %s11, %s118
    %s120 = sld [smem:[#allocation3]]
    %v121 = vld [vmem:[%s1] sm:$0x1]
    %v122 = vld [vmem:[%s2] sm:$0x1]
    %v123 = vld [vmem:[%s3] sm:$0x1]
    %v124 = vld [vmem:[#allocation4] sm:$0xff]
    %v125 = vld [vmem:[#allocation4 + $0x8] sm:$0xff]
    %v126 = vld [vmem:[#allocation4 + $0x10] sm:$0xff]
    %v127 = vld [vmem:[#allocation4 + $0x18] sm:$0xff]
    %v128 = vld [vmem:[#allocation7] sm:$0xff]
    %v129 = vld [vmem:[#allocation7 + $0x8] sm:$0xff]
    %v130 = vld [vmem:[#allocation7 + $0x10] sm:$0xff]
    %v131 = vld [vmem:[#allocation7 + $0x18] sm:$0xff]
    %v132 = vld [vmem:[#allocation7 + $0x20] sm:$0xff]
    %v133 = vld [vmem:[#allocation7 + $0x28] sm:$0xff]
    %v134 = vld [vmem:[#allocation7 + $0x30] sm:$0xff]
    %v135 = vld [vmem:[#allocation7 + $0x38] sm:$0xff]
    %v136 = vld [vmem:[#allocation7 + $0x40] sm:$0xff]
    %v137 = vld [vmem:[#allocation7 + $0x48] sm:$0xff]
    %v138 = vld [vmem:[#allocation7 + $0x50] sm:$0xff]
    %v139 = vld [vmem:[#allocation7 + $0x58] sm:$0xff]
    %v140 = vld [vmem:[#allocation7 + $0x60] sm:$0xff]
    %v141 = vld [vmem:[#allocation7 + $0x68] sm:$0xff]
    %v142 = vld [vmem:[#allocation7 + $0x70] sm:$0xff]
    %v143 = vld [vmem:[#allocation7 + $0x78] sm:$0xff]
    %v144 = vld [vmem:[#allocation7 + $0x80] sm:$0xff]
    %v145 = vld [vmem:[#allocation7 + $0x88] sm:$0xff]
    %v146 = vld [vmem:[#allocation7 + $0x90] sm:$0xff]
    %v147 = vld [vmem:[#allocation7 + $0x98] sm:$0xff]
    %v148 = vld [vmem:[#allocation7 + $0xa0] sm:$0xff]
    %v149 = vld [vmem:[#allocation7 + $0xa8] sm:$0xff]
    %v150 = vld [vmem:[#allocation7 + $0xb0] sm:$0xff]
    %v151 = vld [vmem:[#allocation7 + $0xb8] sm:$0xff]
    %v152 = vld [vmem:[#allocation7 + $0xc0] sm:$0xff]
    %v153 = vld [vmem:[#allocation7 + $0xc8] sm:$0xff]
    %v154 = vld [vmem:[#allocation7 + $0xd0] sm:$0xff]
    %v155 = vld [vmem:[#allocation7 + $0xd8] sm:$0xff]
    %v156 = vld [vmem:[#allocation7 + $0xe0] sm:$0xff]
    %v157 = vld [vmem:[#allocation7 + $0xe8] sm:$0xff]
    %v158 = vld [vmem:[#allocation7 + $0xf0] sm:$0xff]
    %v159 = vld [vmem:[#allocation7 + $0xf8] sm:$0xff]
    %v160 = vld [vmem:[#allocation7 + $0x100] sm:$0xff]
    %v161 = vld [vmem:[#allocation7 + $0x108] sm:$0xff]
    %v162 = vld [vmem:[#allocation7 + $0x110] sm:$0xff]
    %v163 = vld [vmem:[#allocation7 + $0x118] sm:$0xff]
    %v164 = vld [vmem:[#allocation7 + $0x120] sm:$0xff]
    %v165 = vld [vmem:[#allocation7 + $0x128] sm:$0xff]
    %v166 = vld [vmem:[#allocation7 + $0x130] sm:$0xff]
    %v167 = vld [vmem:[#allocation7 + $0x138] sm:$0xff]
    %v168 = vld [vmem:[#allocation7 + $0x140] sm:$0xff]
    %v169 = vld [vmem:[#allocation7 + $0x148] sm:$0xff]
    %v170 = vld [vmem:[#allocation7 + $0x150] sm:$0xff]
    %v171 = vld [vmem:[#allocation7 + $0x158] sm:$0xff]
    %v172 = vld [vmem:[#allocation7 + $0x160] sm:$0xff]
    %v173 = vld [vmem:[#allocation7 + $0x168] sm:$0xff]
    %v174 = vld [vmem:[#allocation7 + $0x170] sm:$0xff]
    %v175 = vld [vmem:[#allocation7 + $0x178] sm:$0xff]
    %v176 = vld [vmem:[#allocation7 + $0x180] sm:$0xff]
    %v177 = vld [vmem:[#allocation7 + $0x188] sm:$0xff]
    %v178 = vld [vmem:[#allocation7 + $0x190] sm:$0xff]
    %v179 = vld [vmem:[#allocation7 + $0x198] sm:$0xff]
    %v180 = vld [vmem:[#allocation7 + $0x1a0] sm:$0xff]
    %v181 = vld [vmem:[#allocation7 + $0x1a8] sm:$0xff]
    %v182 = vld [vmem:[#allocation7 + $0x1b0] sm:$0xff]
    %v183 = vld [vmem:[#allocation7 + $0x1b8] sm:$0xff]
    %v184 = vld [vmem:[#allocation7 + $0x1c0] sm:$0xff]
    %v185 = vld [vmem:[#allocation7 + $0x1c8] sm:$0xff]
    %v186 = vld [vmem:[#allocation7 + $0x1d0] sm:$0xff]
    %v187 = vld [vmem:[#allocation7 + $0x1d8] sm:$0xff]
    %v188 = vld [vmem:[#allocation7 + $0x1e0] sm:$0xff]
    %v189 = vld [vmem:[#allocation7 + $0x1e8] sm:$0xff]
    %v190 = vld [vmem:[#allocation7 + $0x1f0] sm:$0xff]
    %v191 = vld [vmem:[#allocation7 + $0x1f8] sm:$0xff]
    %192 = vmatprep.subr.mxu0 %v189
    %193 = vmatpush1.msra.mxu0 %v188
    %194 = vmatprep.subr.mxu0 %v185
    %195 = vmatpush1.msra.mxu0 %v184
    %196 = vmatprep.subr.mxu0 %v181
    %197 = vmatpush1.msra.mxu0 %v180
    %198 = vmatprep.subr.mxu0 %v177
    %199 = vmatpush1.msra.mxu0 %v176
    %200 = vmatprep.subr.mxu0 %v173
    %201 = vmatpush1.msra.mxu0 %v172
    %202 = vmatprep.subr.mxu0 %v169
    %203 = vmatpush1.msra.mxu0 %v168
    %204 = vmatprep.subr.mxu0 %v165
    %205 = vmatpush1.msra.mxu0 %v164
    %206 = vmatprep.subr.mxu0 %v161
    %207 = vmatpush1.msra.mxu0 %v160
    %208 = vmatprep.subr.mxu0 %v157
    %209 = vmatpush1.msra.mxu0 %v156
    %210 = vmatprep.subr.mxu0 %v153
    %211 = vmatpush1.msra.mxu0 %v152
    %212 = vmatprep.subr.mxu0 %v149
    %213 = vmatpush1.msra.mxu0 %v148
    %214 = vmatprep.subr.mxu0 %v145
    %215 = vmatpush1.msra.mxu0 %v144
    %216 = vmatprep.subr.mxu0 %v141
    %217 = vmatpush1.msra.mxu0 %v140
    %218 = vmatprep.subr.mxu0 %v137
    %219 = vmatpush1.msra.mxu0 %v136
    %220 = vmatprep.subr.mxu0 %v133
    %221 = vmatpush1.msra.mxu0 %v132
    %222 = vmatprep.subr.mxu0 %v129
    %223 = vmatpush1.msra.mxu0 %v128
    %224 = vmatprep.subr.mxu0 0.0
    %225 = vmatpush2.msra.mxu0 0.0
    %226 = vmatprep.subr.mxu0 0.0
    %227 = vmatpush2.msra.mxu0 0.0
    %228 = vmatprep.subr.mxu0 0.0
    %229 = vmatpush2.msra.mxu0 0.0
    %230 = vmatprep.subr.mxu0 0.0
    %231 = vmatpush2.msra.mxu0 0.0
    %232 = vmatprep.subr.mxu0 0.0
    %233 = vmatpush2.msra.mxu0 0.0
    %234 = vmatprep.subr.mxu0 0.0
    %235 = vmatpush2.msra.mxu0 0.0
    %236 = vmatprep.subr.mxu0 0.0
    %237 = vmatpush2.msra.mxu0 0.0
    %238 = vmatprep.subr.mxu0 0.0
    %239 = vmatpush2.msra.mxu0 0.0
    %240 = vmatprep.subr.mxu0 0.0
    %241 = vmatpush2.msra.mxu0 0.0
    %242 = vmatprep.subr.mxu0 0.0
    %243 = vmatpush2.msra.mxu0 0.0
    %244 = vmatprep.subr.mxu0 0.0
    %245 = vmatpush2.msra.mxu0 0.0
    %246 = vmatprep.subr.mxu0 0.0
    %247 = vmatpush2.msra.mxu0 0.0
    %248 = vmatprep.subr.mxu0 0.0
    %249 = vmatpush2.msra.mxu0 0.0
    %250 = vmatprep.subr.mxu0 0.0
    %251 = vmatpush2.msra.mxu0 0.0
    %252 = vmatprep.subr.mxu0 0.0
    %253 = vmatpush2.msra.mxu0 0.0
    %254 = vmatprep.subr.mxu0 0.0
    %255 = vmatpush2.msra.mxu0 0.0
    %256 = vmatprep.mubr.f32.mxu0 0.0
    %257 = vmatmul.mubr.f32.gmra.mxu0 %v122
    %v258 = vpop.f32.mrf.mxu0
    %v259 = vadd.f32 0.0, %v258
    %v260 = vpop.f32.mrf.mxu0
    %v261 = vadd.f32 0.0, %v260
    %262 = vdwg.mxu0
    %263 = vmatprep.subr.mxu0 %v191
    %264 = vmatpush1.msra.mxu0 %v190
    %265 = vmatprep.subr.mxu0 %v187
    %266 = vmatpush1.msra.mxu0 %v186
    %267 = vmatprep.subr.mxu0 %v183
    %268 = vmatpush1.msra.mxu0 %v182
    %269 = vmatprep.subr.mxu0 %v179
    %270 = vmatpush1.msra.mxu0 %v178
    %271 = vmatprep.subr.mxu0 %v175
    %272 = vmatpush1.msra.mxu0 %v174
    %273 = vmatprep.subr.mxu0 %v171
    %274 = vmatpush1.msra.mxu0 %v170
    %275 = vmatprep.subr.mxu0 %v167
    %276 = vmatpush1.msra.mxu0 %v166
    %277 = vmatprep.subr.mxu0 %v163
    %278 = vmatpush1.msra.mxu0 %v162
    %279 = vmatprep.subr.mxu0 %v159
    %280 = vmatpush1.msra.mxu0 %v158
    %281 = vmatprep.subr.mxu0 %v155
    %282 = vmatpush1.msra.mxu0 %v154
    %283 = vmatprep.subr.mxu0 %v151
    %284 = vmatpush1.msra.mxu0 %v150
    %285 = vmatprep.subr.mxu0 %v147
    %286 = vmatpush1.msra.mxu0 %v146
    %287 = vmatprep.subr.mxu0 %v143
    %288 = vmatpush1.msra.mxu0 %v142
    %289 = vmatprep.subr.mxu0 %v139
    %290 = vmatpush1.msra.mxu0 %v138
    %291 = vmatprep.subr.mxu0 %v135
    %292 = vmatpush1.msra.mxu0 %v134
    %293 = vmatprep.subr.mxu0 %v131
    %294 = vmatpush1.msra.mxu0 %v130
    %295 = vmatprep.subr.mxu0 0.0
    %296 = vmatpush2.msra.mxu0 0.0
    %297 = vmatprep.subr.mxu0 0.0
    %298 = vmatpush2.msra.mxu0 0.0
    %299 = vmatprep.subr.mxu0 0.0
    %300 = vmatpush2.msra.mxu0 0.0
    %301 = vmatprep.subr.mxu0 0.0
    %302 = vmatpush2.msra.mxu0 0.0
    %303 = vmatprep.subr.mxu0 0.0
    %304 = vmatpush2.msra.mxu0 0.0
    %305 = vmatprep.subr.mxu0 0.0
    %306 = vmatpush2.msra.mxu0 0.0
    %307 = vmatprep.subr.mxu0 0.0
    %308 = vmatpush2.msra.mxu0 0.0
    %309 = vmatprep.subr.mxu0 0.0
    %310 = vmatpush2.msra.mxu0 0.0
    %311 = vmatprep.subr.mxu0 0.0
    %312 = vmatpush2.msra.mxu0 0.0
    %313 = vmatprep.subr.mxu0 0.0
    %314 = vmatpush2.msra.mxu0 0.0
    %315 = vmatprep.subr.mxu0 0.0
    %316 = vmatpush2.msra.mxu0 0.0
    %317 = vmatprep.subr.mxu0 0.0
    %318 = vmatpush2.msra.mxu0 0.0
    %319 = vmatprep.subr.mxu0 0.0
    %320 = vmatpush2.msra.mxu0 0.0
    %321 = vmatprep.subr.mxu0 0.0
    %322 = vmatpush2.msra.mxu0 0.0
    %323 = vmatprep.subr.mxu0 0.0
    %324 = vmatpush2.msra.mxu0 0.0
    %325 = vmatprep.subr.mxu0 0.0
    %326 = vmatpush2.msra.mxu0 0.0
    %327 = vmatprep.mubr.f32.mxu0 0.0
    %328 = vmatmul.mubr.f32.gmra.mxu0 %v122
    %v329 = vpop.f32.mrf.mxu0
    %v330 = vadd.f32 0.0, %v329
    %v331 = vpop.f32.mrf.mxu0
    %v332 = vadd.f32 0.0, %v331
    %333 = vdwg.mxu0
    %vm334 = vcmask 64512
    %v336 = vsel %vm334, %v121, 0
    %338 = vmatprep.subr.mxu0 0.0
    %339 = vmatpush1.msra.mxu0 0.0
    %340 = vmatprep.subr.mxu0 0.0
    %341 = vmatpush1.msra.mxu0 0.0
    %342 = vmatprep.subr.mxu0 0.0
    %343 = vmatpush1.msra.mxu0 0.0
    %344 = vmatprep.subr.mxu0 0.0
    %345 = vmatpush1.msra.mxu0 0.0
    %346 = vmatprep.subr.mxu0 0.0
    %347 = vmatpush1.msra.mxu0 0.0
    %348 = vmatprep.subr.mxu0 0.0
    %349 = vmatpush1.msra.mxu0 0.0
    %350 = vmatprep.subr.mxu0 0.0
    %351 = vmatpush1.msra.mxu0 0.0
    %352 = vmatprep.subr.mxu0 0.0
    %353 = vmatpush1.msra.mxu0 0.0
    %354 = vmatprep.subr.mxu0 0.0
    %355 = vmatpush1.msra.mxu0 0.0
    %356 = vmatprep.subr.mxu0 0.0
    %357 = vmatpush1.msra.mxu0 0.0
    %358 = vmatprep.subr.mxu0 0.0
    %359 = vmatpush1.msra.mxu0 0.0
    %360 = vmatprep.subr.mxu0 0.0
    %361 = vmatpush1.msra.mxu0 0.0
    %362 = vmatprep.subr.mxu0 0.0
    %363 = vmatpush1.msra.mxu0 0.0
    %364 = vmatprep.subr.mxu0 0.0
    %365 = vmatpush1.msra.mxu0 0.0
    %366 = vmatprep.subr.mxu0 0.0
    %367 = vmatpush1.msra.mxu0 0.0
    %368 = vmatprep.subr.mxu0 %v125
    %369 = vmatpush1.msra.mxu0 %v124
    %370 = vmatprep.subr.mxu0 0.0
    %371 = vmatpush2.msra.mxu0 0.0
    %372 = vmatprep.subr.mxu0 0.0
    %373 = vmatpush2.msra.mxu0 0.0
    %374 = vmatprep.subr.mxu0 0.0
    %375 = vmatpush2.msra.mxu0 0.0
    %376 = vmatprep.subr.mxu0 0.0
    %377 = vmatpush2.msra.mxu0 0.0
    %378 = vmatprep.subr.mxu0 0.0
    %379 = vmatpush2.msra.mxu0 0.0
    %380 = vmatprep.subr.mxu0 0.0
    %381 = vmatpush2.msra.mxu0 0.0
    %382 = vmatprep.subr.mxu0 0.0
    %383 = vmatpush2.msra.mxu0 0.0
    %384 = vmatprep.subr.mxu0 0.0
    %385 = vmatpush2.msra.mxu0 0.0
    %386 = vmatprep.subr.mxu0 0.0
    %387 = vmatpush2.msra.mxu0 0.0
    %388 = vmatprep.subr.mxu0 0.0
    %389 = vmatpush2.msra.mxu0 0.0
    %390 = vmatprep.subr.mxu0 0.0
    %391 = vmatpush2.msra.mxu0 0.0
    %392 = vmatprep.subr.mxu0 0.0
    %393 = vmatpush2.msra.mxu0 0.0
    %394 = vmatprep.subr.mxu0 0.0
    %395 = vmatpush2.msra.mxu0 0.0
    %396 = vmatprep.subr.mxu0 0.0
    %397 = vmatpush2.msra.mxu0 0.0
    %398 = vmatprep.subr.mxu0 0.0
    %399 = vmatpush2.msra.mxu0 0.0
    %400 = vmatprep.subr.mxu0 0.0
    %401 = vmatpush2.msra.mxu0 0.0
    %402 = vmatprep.mubr.f32.mxu0 0.0
    %403 = vmatmul.mubr.f32.gmra.mxu0 %v336
    %v404 = vpop.f32.mrf.mxu0
    %v405 = vadd.f32 %v259, %v404
    %v406 = vpop.f32.mrf.mxu0
    %v407 = vadd.f32 %v261, %v406
    %408 = vdwg.mxu0
    %409 = vmatprep.subr.mxu0 0.0
    %410 = vmatpush1.msra.mxu0 0.0
    %411 = vmatprep.subr.mxu0 0.0
    %412 = vmatpush1.msra.mxu0 0.0
    %413 = vmatprep.subr.mxu0 0.0
    %414 = vmatpush1.msra.mxu0 0.0
    %415 = vmatprep.subr.mxu0 0.0
    %416 = vmatpush1.msra.mxu0 0.0
    %417 = vmatprep.subr.mxu0 0.0
    %418 = vmatpush1.msra.mxu0 0.0
    %419 = vmatprep.subr.mxu0 0.0
    %420 = vmatpush1.msra.mxu0 0.0
    %421 = vmatprep.subr.mxu0 0.0
    %422 = vmatpush1.msra.mxu0 0.0
    %423 = vmatprep.subr.mxu0 0.0
    %424 = vmatpush1.msra.mxu0 0.0
    %425 = vmatprep.subr.mxu0 0.0
    %426 = vmatpush1.msra.mxu0 0.0
    %427 = vmatprep.subr.mxu0 0.0
    %428 = vmatpush1.msra.mxu0 0.0
    %429 = vmatprep.subr.mxu0 0.0
    %430 = vmatpush1.msra.mxu0 0.0
    %431 = vmatprep.subr.mxu0 0.0
    %432 = vmatpush1.msra.mxu0 0.0
    %433 = vmatprep.subr.mxu0 0.0
    %434 = vmatpush1.msra.mxu0 0.0
    %435 = vmatprep.subr.mxu0 0.0
    %436 = vmatpush1.msra.mxu0 0.0
    %437 = vmatprep.subr.mxu0 0.0
    %438 = vmatpush1.msra.mxu0 0.0
    %439 = vmatprep.subr.mxu0 %v127
    %440 = vmatpush1.msra.mxu0 %v126
    %441 = vmatprep.subr.mxu0 0.0
    %442 = vmatpush2.msra.mxu0 0.0
    %443 = vmatprep.subr.mxu0 0.0
    %444 = vmatpush2.msra.mxu0 0.0
    %445 = vmatprep.subr.mxu0 0.0
    %446 = vmatpush2.msra.mxu0 0.0
    %447 = vmatprep.subr.mxu0 0.0
    %448 = vmatpush2.msra.mxu0 0.0
    %449 = vmatprep.subr.mxu0 0.0
    %450 = vmatpush2.msra.mxu0 0.0
    %451 = vmatprep.subr.mxu0 0.0
    %452 = vmatpush2.msra.mxu0 0.0
    %453 = vmatprep.subr.mxu0 0.0
    %454 = vmatpush2.msra.mxu0 0.0
    %455 = vmatprep.subr.mxu0 0.0
    %456 = vmatpush2.msra.mxu0 0.0
    %457 = vmatprep.subr.mxu0 0.0
    %458 = vmatpush2.msra.mxu0 0.0
    %459 = vmatprep.subr.mxu0 0.0
    %460 = vmatpush2.msra.mxu0 0.0
    %461 = vmatprep.subr.mxu0 0.0
    %462 = vmatpush2.msra.mxu0 0.0
    %463 = vmatprep.subr.mxu0 0.0
    %464 = vmatpush2.msra.mxu0 0.0
    %465 = vmatprep.subr.mxu0 0.0
    %466 = vmatpush2.msra.mxu0 0.0
    %467 = vmatprep.subr.mxu0 0.0
    %468 = vmatpush2.msra.mxu0 0.0
    %469 = vmatprep.subr.mxu0 0.0
    %470 = vmatpush2.msra.mxu0 0.0
    %471 = vmatprep.subr.mxu0 0.0
    %472 = vmatpush2.msra.mxu0 0.0
    %473 = vmatprep.mubr.f32.mxu0 0.0
    %474 = vmatmul.mubr.f32.gmra.mxu0 %v336
    %v475 = vpop.f32.mrf.mxu0
    %v476 = vadd.f32 %v330, %v475
    %v477 = vpop.f32.mrf.mxu0
    %v478 = vadd.f32 %v332, %v477
    %479 = vdwg.mxu0
    %v480 = vld [vmem:[%s6] sm:$0xf]
    %v482 = vlaneseq
    %v483 = vshrl.u32 %v482, 7
    %v484 = vsub.s32 0, %v483
    %v485 = vrot.slane %v480, %v484
    %v486 = vlaneseq
    %v487 = vshrl.u32 %v486, 7
    %v488 = vsub.s32 1, %v487
    %v489 = vrot.slane %v480, %v488
    %v490 = vlaneseq
    %v491 = vshrl.u32 %v490, 7
    %v492 = vsub.s32 2, %v491
    %v493 = vrot.slane %v480, %v492
    %v494 = vlaneseq
    %v495 = vshrl.u32 %v494, 7
    %v496 = vsub.s32 3, %v495
    %v497 = vrot.slane %v480, %v496
    %v502 = vadd.f32 %v405, %v485
    %v503 = vadd.f32 %v407, %v489
    %v504 = vadd.f32 %v476, %v493
    %v505 = vadd.f32 %v478, %v497
    %v506 = vxor.u32 %v502, 2147483648
    %v507 = vmul.f32 %v506, 1.442695
    %v508 = vpow.pop %v507
    %v509 = vadd.f32 %v508, 1.0
    %v510 = vrcp.pop %v509
    %v511 = vmul.f32 1.0, %v510
    %v512 = vxor.u32 %v503, 2147483648
    %v513 = vmul.f32 %v512, 1.442695
    %v514 = vpow.pop %v513
    %v515 = vadd.f32 %v514, 1.0
    %v516 = vrcp.pop %v515
    %v517 = vmul.f32 1.0, %v516
    %v518 = vtanh.pop %v504
    %v519 = vxor.u32 %v505, 2147483648
    %v520 = vmul.f32 %v519, 1.442695
    %v521 = vpow.pop %v520
    %v522 = vadd.f32 %v521, 1.0
    %v523 = vrcp.pop %v522
    %v524 = vmul.f32 1.0, %v523
    %v525 = vmul.f32 %v517, %v123
    %v526 = vmul.f32 %v511, %v518
    %v527 = vadd.f32 %v525, %v526
    %v528 = vtanh.pop %v527
    %v529 = vmul.f32 %v524, %v528
    %530 = vst [vmem:[#allocation10] sm:$0x1] %v527
    %531 = vst [vmem:[#allocation9] sm:$0x1] %v529
    %v532 = vld [vmem:[%s7] sm:$0xff]
    %v533 = vld [vmem:[%s7 + $0x8] sm:$0xff]
    %v534 = vld [vmem:[%s7 + $0x10] sm:$0xff]
    %v535 = vld [vmem:[%s7 + $0x18] sm:$0xff]
    %v536 = vld [vmem:[%s7 + $0x20] sm:$0xff]
    %v537 = vld [vmem:[%s7 + $0x28] sm:$0xff]
    %v538 = vld [vmem:[%s7 + $0x30] sm:$0xff]
    %v539 = vld [vmem:[%s7 + $0x38] sm:$0xff]
    %v540 = vld [vmem:[%s7 + $0x40] sm:$0xff]
    %v541 = vld [vmem:[%s7 + $0x48] sm:$0xff]
    %v542 = vld [vmem:[%s7 + $0x50] sm:$0xff]
    %v543 = vld [vmem:[%s7 + $0x58] sm:$0xff]
    %v544 = vld [vmem:[%s7 + $0x60] sm:$0xff]
    %v545 = vld [vmem:[%s7 + $0x68] sm:$0xff]
    %v546 = vld [vmem:[%s7 + $0x70] sm:$0xff]
    %v547 = vld [vmem:[%s7 + $0x78] sm:$0xff]
    %v548 = vld [vmem:[%s8] sm:$0x1]
    %549 = vmatprep.subr.mxu0 0.0
    %550 = vmatpush1.msra.mxu0 %v547
    %551 = vmatprep.subr.mxu0 0.0
    %552 = vmatpush1.msra.mxu0 %v546
    %553 = vmatprep.subr.mxu0 0.0
    %554 = vmatpush1.msra.mxu0 %v545
    %555 = vmatprep.subr.mxu0 0.0
    %556 = vmatpush1.msra.mxu0 %v544
    %557 = vmatprep.subr.mxu0 0.0
    %558 = vmatpush1.msra.mxu0 %v543
    %559 = vmatprep.subr.mxu0 0.0
    %560 = vmatpush1.msra.mxu0 %v542
    %561 = vmatprep.subr.mxu0 0.0
    %562 = vmatpush1.msra.mxu0 %v541
    %563 = vmatprep.subr.mxu0 0.0
    %564 = vmatpush1.msra.mxu0 %v540
    %565 = vmatprep.subr.mxu0 0.0
    %566 = vmatpush1.msra.mxu0 %v539
    %567 = vmatprep.subr.mxu0 0.0
    %568 = vmatpush1.msra.mxu0 %v538
    %569 = vmatprep.subr.mxu0 0.0
    %570 = vmatpush1.msra.mxu0 %v537
    %571 = vmatprep.subr.mxu0 0.0
    %572 = vmatpush1.msra.mxu0 %v536
    %573 = vmatprep.subr.mxu0 0.0
    %574 = vmatpush1.msra.mxu0 %v535
    %575 = vmatprep.subr.mxu0 0.0
    %576 = vmatpush1.msra.mxu0 %v534
    %577 = vmatprep.subr.mxu0 0.0
    %578 = vmatpush1.msra.mxu0 %v533
    %579 = vmatprep.subr.mxu0 0.0
    %580 = vmatpush1.msra.mxu0 %v532
    %581 = vmatprep.subr.mxu0 0.0
    %582 = vmatpush2.msra.mxu0 0.0
    %583 = vmatprep.subr.mxu0 0.0
    %584 = vmatpush2.msra.mxu0 0.0
    %585 = vmatprep.subr.mxu0 0.0
    %586 = vmatpush2.msra.mxu0 0.0
    %587 = vmatprep.subr.mxu0 0.0
    %588 = vmatpush2.msra.mxu0 0.0
    %589 = vmatprep.subr.mxu0 0.0
    %590 = vmatpush2.msra.mxu0 0.0
    %591 = vmatprep.subr.mxu0 0.0
    %592 = vmatpush2.msra.mxu0 0.0
    %593 = vmatprep.subr.mxu0 0.0
    %594 = vmatpush2.msra.mxu0 0.0
    %595 = vmatprep.subr.mxu0 0.0
    %596 = vmatpush2.msra.mxu0 0.0
    %597 = vmatprep.subr.mxu0 0.0
    %598 = vmatpush2.msra.mxu0 0.0
    %599 = vmatprep.subr.mxu0 0.0
    %600 = vmatpush2.msra.mxu0 0.0
    %601 = vmatprep.subr.mxu0 0.0
    %602 = vmatpush2.msra.mxu0 0.0
    %603 = vmatprep.subr.mxu0 0.0
    %604 = vmatpush2.msra.mxu0 0.0
    %605 = vmatprep.subr.mxu0 0.0
    %606 = vmatpush2.msra.mxu0 0.0
    %607 = vmatprep.subr.mxu0 0.0
    %608 = vmatpush2.msra.mxu0 0.0
    %609 = vmatprep.subr.mxu0 0.0
    %610 = vmatpush2.msra.mxu0 0.0
    %611 = vmatprep.subr.mxu0 0.0
    %612 = vmatpush2.msra.mxu0 0.0
    %613 = vmatprep.mubr.f32.mxu0 0.0
    %614 = vmatmul.mubr.f32.gmra.mxu0 %v529
    %v615 = vpop.f32.mrf.mxu0
    %v616 = vadd.f32 %v548, %v615
    %v617 = vpop.f32.mrf.mxu0
    %618 = vdwg.mxu0
    %v619 = vmax.f32 %v616, 0.0
    %v620 = vld [vmem:[%s109] sm:$0xff]
    %v621 = vld [vmem:[%s109 + $0x8] sm:$0xff]
    %v622 = vld [vmem:[%s109 + $0x10] sm:$0xff]
    %v623 = vld [vmem:[%s109 + $0x18] sm:$0xff]
    %v624 = vld [vmem:[%s109 + $0x20] sm:$0xff]
    %v625 = vld [vmem:[%s109 + $0x28] sm:$0xff]
    %v626 = vld [vmem:[%s109 + $0x30] sm:$0xff]
    %v627 = vld [vmem:[%s109 + $0x38] sm:$0xff]
    %v628 = vld [vmem:[%s114] sm:$0x1]
    %v629 = vld [vmem:[%s119] sm:$0x1]
    %vm630 = vcmask 523264
    %v632 = vsel %vm630, %v619, 0
    %634 = vmatprep.subr.mxu0 0.0
    %635 = vmatpush1.msra.mxu0 0.0
    %636 = vmatprep.subr.mxu0 0.0
    %637 = vmatpush1.msra.mxu0 0.0
    %638 = vmatprep.subr.mxu0 0.0
    %639 = vmatpush1.msra.mxu0 0.0
    %640 = vmatprep.subr.mxu0 0.0
    %641 = vmatpush1.msra.mxu0 0.0
    %642 = vmatprep.subr.mxu0 0.0
    %643 = vmatpush1.msra.mxu0 0.0
    %644 = vmatprep.subr.mxu0 0.0
    %645 = vmatpush1.msra.mxu0 0.0
    %646 = vmatprep.subr.mxu0 0.0
    %647 = vmatpush1.msra.mxu0 0.0
    %648 = vmatprep.subr.mxu0 0.0
    %649 = vmatpush1.msra.mxu0 0.0
    %650 = vmatprep.subr.mxu0 0.0
    %651 = vmatpush1.msra.mxu0 %v627
    %652 = vmatprep.subr.mxu0 0.0
    %653 = vmatpush1.msra.mxu0 %v626
    %654 = vmatprep.subr.mxu0 0.0
    %655 = vmatpush1.msra.mxu0 %v625
    %656 = vmatprep.subr.mxu0 0.0
    %657 = vmatpush1.msra.mxu0 %v624
    %658 = vmatprep.subr.mxu0 0.0
    %659 = vmatpush1.msra.mxu0 %v623
    %660 = vmatprep.subr.mxu0 0.0
    %661 = vmatpush1.msra.mxu0 %v622
    %662 = vmatprep.subr.mxu0 0.0
    %663 = vmatpush1.msra.mxu0 %v621
    %664 = vmatprep.subr.mxu0 0.0
    %665 = vmatpush1.msra.mxu0 %v620
    %666 = vmatprep.subr.mxu0 0.0
    %667 = vmatpush2.msra.mxu0 0.0
    %668 = vmatprep.subr.mxu0 0.0
    %669 = vmatpush2.msra.mxu0 0.0
    %670 = vmatprep.subr.mxu0 0.0
    %671 = vmatpush2.msra.mxu0 0.0
    %672 = vmatprep.subr.mxu0 0.0
    %673 = vmatpush2.msra.mxu0 0.0
    %674 = vmatprep.subr.mxu0 0.0
    %675 = vmatpush2.msra.mxu0 0.0
    %676 = vmatprep.subr.mxu0 0.0
    %677 = vmatpush2.msra.mxu0 0.0
    %678 = vmatprep.subr.mxu0 0.0
    %679 = vmatpush2.msra.mxu0 0.0
    %680 = vmatprep.subr.mxu0 0.0
    %681 = vmatpush2.msra.mxu0 0.0
    %682 = vmatprep.subr.mxu0 0.0
    %683 = vmatpush2.msra.mxu0 0.0
    %684 = vmatprep.subr.mxu0 0.0
    %685 = vmatpush2.msra.mxu0 0.0
    %686 = vmatprep.subr.mxu0 0.0
    %687 = vmatpush2.msra.mxu0 0.0
    %688 = vmatprep.subr.mxu0 0.0
    %689 = vmatpush2.msra.mxu0 0.0
    %690 = vmatprep.subr.mxu0 0.0
    %691 = vmatpush2.msra.mxu0 0.0
    %692 = vmatprep.subr.mxu0 0.0
    %693 = vmatpush2.msra.mxu0 0.0
    %694 = vmatprep.subr.mxu0 0.0
    %695 = vmatpush2.msra.mxu0 0.0
    %696 = vmatprep.subr.mxu0 0.0
    %697 = vmatpush2.msra.mxu0 0.0
    %698 = vmatprep.mubr.f32.mxu0 0.0
    %699 = vmatmul.mubr.f32.gmra.mxu0 %v632
    %v700 = vpop.f32.mrf.mxu0
    %v701 = vadd.f32 %v628, %v700
    %v702 = vpop.f32.mrf.mxu0
    %703 = vdwg.mxu0
    %v704 = vtanh.pop %v701
    %vm705 = vcmp.gt.f32.partialorder %v629, 0.0
    %v706 = vsel %vm705, %v704, -1e+30
    %vm707 = vcmask 1040384
    %v708 = vsel %vm707, %v706, -inf
    %709 = vmax.xlane.f32.xlu0 %v708
    %v710 = vpop.xlane.xlu0 %709
    %v711 = vsub.f32 %v706, %v710
    %v712 = vmul.f32 %v711, 1.442695
    %v713 = vpow.pop %v712
    %v714 = vsel %vm705, %v713, 0.0
    %v715 = vsel %vm707, %v714, 0.0
    %716 = vadd.xlane.f32.xlu0 %v715
    %v717 = vpop.xlane.xlu0 %716
    %v718 = vlog2.pop %v717
    %v719 = vmul.f32 %v718, 0.6931472
    %v720 = vsub.f32 %v711, %v719
    %v721 = vsel %vm705, %v704, 0.0
    %722 = vst [vmem:[#allocation12] sm:$0x1] %v721
    %v723 = vsel %vm705, %v720, -1e+30
    %724 = vst [vmem:[#allocation13] sm:$0x1] %v723
    // Predicated region
    $region54: #{rnn_categorical_actor_forward.1} parent=1 // pred_check
      _
    $region55: #{rnn_categorical_actor_forward.1} parent=1 // pred_check_branch
      %726 = sbr.rel (0) target = $region57
    $region56: #{rnn_categorical_actor_forward.1} parent=1 // pred_region
      %s728 = ssub.s32 16, 16
      %729 = vsyncadd [#allocation6], %s728
      %s731 = sshll.u32 [#allocation9], 4
      %s732 = int_to_ptr.vmem [resolvable:$true] %s731
      %734 = dma.vmem_to_hbm [thread:$0]  %s732, 16, %s12, [#allocation6]
    $region57: #{rnn_categorical_actor_forward.1} parent=1 // pred_fallthru
      _
    // Predicated region
    $region58: #{rnn_categorical_actor_forward.1} parent=1 // pred_check
      _
    $region59: #{rnn_categorical_actor_forward.1} parent=1 // pred_check_branch
      %736 = sbr.rel (0) target = $region61
    $region60: #{rnn_categorical_actor_forward.1} parent=1 // pred_region
      %s738 = ssub.s32 16, 16
      %739 = vsyncadd [#allocation11], %s738
      %s741 = sshll.u32 [#allocation10], 4
      %s742 = int_to_ptr.vmem [resolvable:$true] %s741
      %744 = dma.vmem_to_hbm [thread:$0]  %s742, 16, %s13, [#allocation11]
    $region61: #{rnn_categorical_actor_forward.1} parent=1 // pred_fallthru
      _
    // Predicated region
    $region62: #{rnn_categorical_actor_forward.1} parent=1 // pred_check
      _
    $region63: #{rnn_categorical_actor_forward.1} parent=1 // pred_check_branch
      %746 = sbr.rel (0) target = $region65
    $region64: #{rnn_categorical_actor_forward.1} parent=1 // pred_region
      %s748 = ssub.s32 16, 16
      %749 = vsyncadd [#allocation11], %s748
      %s751 = sshll.u32 [#allocation12], 4
      %s752 = int_to_ptr.vmem [resolvable:$true] %s751
      %754 = dma.vmem_to_hbm [thread:$0]  %s752, 16, %s14, [#allocation11]
    $region65: #{rnn_categorical_actor_forward.1} parent=1 // pred_fallthru
      _
    // Predicated region
    $region66: #{rnn_categorical_actor_forward.1} parent=1 // pred_check
      _
    $region67: #{rnn_categorical_actor_forward.1} parent=1 // pred_check_branch
      %756 = sbr.rel (0) target = $region69
    $region68: #{rnn_categorical_actor_forward.1} parent=1 // pred_region
      %s758 = ssub.s32 16, 16
      %759 = vsyncadd [#allocation14], %s758
      %s761 = sshll.u32 [#allocation13], 4
      %s762 = int_to_ptr.vmem [resolvable:$true] %s761
      %764 = dma.vmem_to_hbm [thread:$0]  %s762, 16, %s15, [#allocation14]
    $region69: #{rnn_categorical_actor_forward.1} parent=1 // pred_fallthru
      _
    // Predicated region
    $region70: #{rnn_categorical_actor_forward.1} parent=1 // pred_check
      _
    $region71: #{rnn_categorical_actor_forward.1} parent=1 // pred_check_branch
      %766 = sbr.rel (0) target = $region73
    $region72: #{rnn_categorical_actor_forward.1} parent=1 // pred_region
      %767 = dma.done [#allocation6], 16
    $region73: #{rnn_categorical_actor_forward.1} parent=1 // pred_fallthru
      _
    // Predicated region
    $region74: #{rnn_categorical_actor_forward.1} parent=1 // pred_check
      _
    $region75: #{rnn_categorical_actor_forward.1} parent=1 // pred_check_branch
      %769 = sbr.rel (0) target = $region77
    $region76: #{rnn_categorical_actor_forward.1} parent=1 // pred_region
      %770 = dma.done [#allocation11], 16
    $region77: #{rnn_categorical_actor_forward.1} parent=1 // pred_fallthru
      _
    // Predicated region
    $region78: #{rnn_categorical_actor_forward.1} parent=1 // pred_check
      _
    $region79: #{rnn_categorical_actor_forward.1} parent=1 // pred_check_branch
      %772 = sbr.rel (0) target = $region81
    $region80: #{rnn_categorical_actor_forward.1} parent=1 // pred_region
      %773 = dma.done [#allocation11], 16
    $region81: #{rnn_categorical_actor_forward.1} parent=1 // pred_fallthru
      _
    // Predicated region
    $region82: #{rnn_categorical_actor_forward.1} parent=1 // pred_check
      _
    $region83: #{rnn_categorical_actor_forward.1} parent=1 // pred_check_branch
      %775 = sbr.rel (0) target = $region85
    $region84: #{rnn_categorical_actor_forward.1} parent=1 // pred_region
      %776 = dma.done [#allocation14], 16
    $region85: #{rnn_categorical_actor_forward.1} parent=1 // pred_fallthru
      _
    %777 = vsyncpa [#allocation5], 1
    %778 = vsyncpa [#allocation8], 1
    %779 = vsyncpa [#allocation6], 1
    %780 = vsyncpa [#allocation11], 1
    %781 = vsyncpa [#allocation14], 1

</llo_original>
